<compile_context>
chip_gen: v7x
topology: tpu7x:2x2x1
jax: 0.10.0
libtpu: 0.0.40
codegen_flags: <defaults>
</compile_context>

<pallas_src>
import functools

import jax
import jax.numpy as jnp
from jax.experimental import pallas as pl
from jax.experimental.pallas import tpu as pltpu


def _contributions(x, t, mask):
    """Per-element Dice/BCE contributions; mask=None means all elements valid."""
    x = x.astype(jnp.float32)
    t = t.astype(jnp.float32)
    if mask is not None:
        # Select-based masking: garbage/NaN in OOB regions never propagates.
        x = jnp.where(mask, x, 0.0)
        t = jnp.where(mask, t, 0.0)

    p = jax.nn.sigmoid(x)                     # EUP
    log_p_raw = jnp.log(p)                    # EUP (the only extra transcendental)
    log_p = jnp.maximum(log_p_raw, -100.0)    # torch BCE clamps log terms at -100
    # log(1 - sigmoid(x)) == log(sigmoid(x)) - x; patch the two f32 saturation
    # regimes (p==1 -> clamp(log(0)) = -100, p==0 -> log(1) = 0) to match
    # PyTorch exactly without a second log per element.
    log_1mp = jnp.maximum(log_p_raw - x, -100.0)
    log_1mp = jnp.where(p >= 1.0, -100.0, log_1mp)
    log_1mp = jnp.where(p <= 0.0, 0.0, log_1mp)
    bce = -(t * log_p + (1.0 - t) * log_1mp)

    if mask is not None:
        p = jnp.where(mask, p, 0.0)
        bce = jnp.where(mask, bce, 0.0)
    return p * t, p + t, bce                  # intersection, sum(p)+sum(t), BCE


def _dice_bce_kernel(x_ref, t_ref, out_ref, acc_ref, *,
                     n_true: int, block_rows: int, steps: int, lanes: int):
    c = pl.program_id(0)          # split index (parallel; one per TC on v7x)
    k = pl.program_id(1)          # step within split (reduction axis)

    @pl.when(k == 0)
    def _():
        acc_ref[...] = jnp.zeros_like(acc_ref)

    x = x_ref[...]
    t = t_ref[...]

    blk = c * steps + k                       # logical (unclamped) block index
    row0 = blk * block_rows
    block_end = (row0 + block_rows) * lanes   # one past the last logical element

    def fold(v):
        # (block_rows, 128) -> (8, 128) using cross-vreg VPU adds only.
        if block_rows % 8 == 0:
            return v.reshape(block_rows // 8, 8, lanes).sum(axis=0)
        # Rare small-input path (block_rows == rows < 8): one sublane reduce.
        s = jnp.sum(v, axis=0, keepdims=True)
        return jnp.concatenate([s, jnp.zeros((7, lanes), s.dtype)], axis=0)

    def accumulate(mask):
        inter, pt, bce = _contributions(x, t, mask)
        acc_ref[0] += fold(inter)      # sum(sigmoid(x) * t)
        acc_ref[1] += fold(pt)         # sum(sigmoid(x)) + sum(t)
        acc_ref[2] += fold(bce)        # BCE numerator (divided by n outside)

    # Fast path: every element of this block is valid -> no iota/mask work.
    @pl.when(block_end <= n_true)
    def _():
        accumulate(None)

    # Slow path (at most one tail block + one phantom block per split): mask
    # out pad / OOB / duplicated data so it never contributes.
    @pl.when(block_end > n_true)
    def _():
        row_i = jax.lax.broadcasted_iota(jnp.int32, (block_rows, lanes), 0)
        lane_i = jax.lax.broadcasted_iota(jnp.int32, (block_rows, lanes), 1)
        idx = (row0 + row_i) * lanes + lane_i
        accumulate(idx < n_true)

    @pl.when(k == pl.num_programs(1) - 1)
    def _():
        out_ref[...] = acc_ref[...]


def dice_bce_loss(inputs, targets, smooth=1.0, *, block_rows=1024, lanes=128):
    """Matches DiceBCELoss.forward(inputs, targets, smooth)."""
    n = inputs.size
    x = inputs.reshape(-1)
    t = targets.reshape(-1)

    # Pad only when the element count is not lane-aligned (at most 127 elems);
    # the in-kernel mask makes the pad values irrelevant.
    rem = n % lanes
    if rem:
        pad = lanes - rem
        x = jnp.pad(x, (0, pad))
        t = jnp.pad(t, (0, pad))

    rows = x.size // lanes
    x2 = x.reshape(rows, lanes)
    t2 = t.reshape(rows, lanes)

    block_rows = min(block_rows, rows)          # full-dim block for small inputs
    nblocks = pl.cdiv(rows, block_rows)
    num_splits = 2 if nblocks >= 2 else 1       # one split per TensorCore on v7x
    steps = pl.cdiv(nblocks, num_splits)

    kernel = functools.partial(_dice_bce_kernel, n_true=int(n),
                               block_rows=block_rows, steps=steps, lanes=lanes)

    def in_map(c, k):
        # Phantom blocks (when nblocks doesn't split evenly) clamp to the last
        # real block; their contribution is fully masked in-kernel.
        return (jnp.minimum(c * steps + k, nblocks - 1), 0)

    partials = pl.pallas_call(
        kernel,
        out_shape=jax.ShapeDtypeStruct((num_splits, 3, 8, lanes), jnp.float32),
        grid_spec=pltpu.PrefetchScalarGridSpec(
            num_scalar_prefetch=0,
            grid=(num_splits, steps),
            in_specs=[
                pl.BlockSpec((block_rows, lanes), in_map),
                pl.BlockSpec((block_rows, lanes), in_map),
            ],
            out_specs=pl.BlockSpec((None, 3, 8, lanes),
                                   lambda c, k: (c, 0, 0, 0)),
            scratch_shapes=[pltpu.VMEM((3, 8, lanes), jnp.float32)],
        ),
        compiler_params=pltpu.CompilerParams(
            dimension_semantics=("parallel", "arbitrary")),
    )(x2, t2)

    # Tiny final reduction (num_splits*3*8*128 floats) done by XLA.
    sums = jnp.sum(partials, axis=(0, 2, 3))
    inter, pt_sum, bce_sum = sums[0], sums[1], sums[2]
    bce_mean = bce_sum / jnp.float32(n)
    dice_loss = 1.0 - (2.0 * inter + smooth) / (pt_sum + smooth)
    return bce_mean + dice_loss


def _reference(inputs, targets, smooth=1.0):
    p = jax.nn.sigmoid(inputs.reshape(-1).astype(jnp.float32))
    t = targets.reshape(-1).astype(jnp.float32)
    inter = jnp.sum(p * t)
    dice = 1.0 - (2.0 * inter + smooth) / (jnp.sum(p) + jnp.sum(t) + smooth)
    bce = jnp.mean(-(t * jnp.maximum(jnp.log(p), -100.0)
                     + (1.0 - t) * jnp.maximum(jnp.log(1.0 - p), -100.0)))
    return bce + dice


if __name__ == "__main__":
    key = jax.random.PRNGKey(0)
    k1, k2, k3, k4, k5, k6 = jax.random.split(key, 6)

    # 1) Segmentation-style shape: N=2, C=4, H=W=16 (lane-aligned, single block).
    x = jax.random.normal(k1, (2, 4, 16, 16), dtype=jnp.float32)        # logits
    y = jax.random.bernoulli(k2, 0.5, (2, 4, 16, 16)).astype(jnp.float32)
    loss = dice_bce_loss(x, y, smooth=1.0)
    jax.block_until_ready(loss)
    ref = _reference(x, y, smooth=1.0)
    assert jnp.allclose(loss, ref, atol=1e-5, rtol=1e-5), (loss, ref)

    # 2) Non-lane-aligned element count -> in-kernel tail masking path.
    x2 = jax.random.normal(k3, (3, 5, 7, 11), dtype=jnp.float32)
    y2 = jax.random.bernoulli(k4, 0.5, (3, 5, 7, 11)).astype(jnp.float32)
    loss2 = dice_bce_loss(x2, y2, smooth=1.0)
    jax.block_until_ready(loss2)
    ref2 = _reference(x2, y2, smooth=1.0)
    assert jnp.allclose(loss2, ref2, atol=1e-5, rtol=1e-5), (loss2, ref2)

    # 3) Multi-block + two-split (per-TensorCore) fast path at small size.
    loss3 = dice_bce_loss(x, y, smooth=1.0, block_rows=8)
    jax.block_until_ready(loss3)
    assert jnp.allclose(loss3, ref, atol=1e-5, rtol=1e-5), (loss3, ref)

    # 4) Partial boundary block + phantom block (rows not divisible by block).
    x4 = jax.random.normal(k5, (1, 1, 19, 128), dtype=jnp.float32)
    y4 = jax.random.bernoulli(k6, 0.5, (1, 1, 19, 128)).astype(jnp.float32)
    loss4 = dice_bce_loss(x4, y4, smooth=1.0, block_rows=8)
    jax.block_until_ready(loss4)
    ref4 = _reference(x4, y4, smooth=1.0)
    assert jnp.allclose(loss4, ref4, atol=1e-5, rtol=1e-5), (loss4, ref4)

    print("KERNEL_OK")
</pallas_src>

<mosaic_0001>
module attributes {stable_mosaic.version = 11 : i64} {
  func.func @_dice_bce_kernel(%arg0: i32, %arg1: i32, %arg2: memref<16x128xf32, #tpu.memory_space<vmem>>, %arg3: memref<16x128xf32, #tpu.memory_space<vmem>>, %arg4: memref<1x3x8x128xf32, #tpu.memory_space<vmem>>, %arg5: memref<3x8x128xf32, #tpu.memory_space<vmem>>) attributes {dimension_semantics = [#tpu.dimension_semantics<parallel>, #tpu.dimension_semantics<arbitrary>], iteration_bounds = array<i64: 1, 1>, scalar_prefetch = 0 : i64, scratch_operands = 1 : i64, tpu.core_type = #tpu.core_type<tc>, window_params = [{transform_indices = @transform_0, window_bounds = array<i64: 16, 128>}, {transform_indices = @transform_1, window_bounds = array<i64: 16, 128>}, {transform_indices = @transform_2, window_bounds = array<i64: 1, 3, 8, 128>}]} {
    %c0_i32 = arith.constant 0 : i32
    %0 = arith.cmpi eq, %arg1, %c0_i32 : i32
    %1 = arith.extui %0 : i1 to i32
    %c0_i32_0 = arith.constant 0 : i32
    %2 = arith.cmpi ne, %1, %c0_i32_0 : i32
    scf.if %2 {
      %cst = arith.constant 0.000000e+00 : f32
      %19 = vector.broadcast %cst : f32 to vector<3x8x128xf32>
      %c0_10 = arith.constant 0 : index
      %c0_11 = arith.constant 0 : index
      %c0_12 = arith.constant 0 : index
      %20 = vector.load %arg5[%c0_10, %c0_11, %c0_12] : memref<3x8x128xf32, #tpu.memory_space<vmem>>, vector<3x8x128xf32>
      tpu.vector_store %arg5[%c0_10, %c0_11, %c0_12], %19 {strides = array<i32>} : memref<3x8x128xf32, #tpu.memory_space<vmem>>, vector<3x8x128xf32>,
    } else {
    }
    %c0 = arith.constant 0 : index
    %c0_1 = arith.constant 0 : index
    %3 = vector.load %arg2[%c0, %c0_1] : memref<16x128xf32, #tpu.memory_space<vmem>>, vector<16x128xf32>
    %c0_2 = arith.constant 0 : index
    %c0_3 = arith.constant 0 : index
    %4 = vector.load %arg3[%c0_2, %c0_3] : memref<16x128xf32, #tpu.memory_space<vmem>>, vector<16x128xf32>
    %c1_i32 = arith.constant 1 : i32
    %5 = arith.muli %arg0, %c1_i32 : i32
    %6 = arith.addi %5, %arg1 : i32
    %c16_i32 = arith.constant 16 : i32
    %7 = arith.muli %6, %c16_i32 : i32
    %c16_i32_4 = arith.constant 16 : i32
    %8 = arith.addi %7, %c16_i32_4 : i32
    %c128_i32 = arith.constant 128 : i32
    %9 = arith.muli %8, %c128_i32 : i32
    %c2048_i32 = arith.constant 2048 : i32
    %10 = arith.cmpi sle, %9, %c2048_i32 : i32
    %11 = arith.extui %10 : i1 to i32
    %c0_i32_5 = arith.constant 0 : i32
    %12 = arith.cmpi ne, %11, %c0_i32_5 : i32
    scf.if %12 {
      %19 = arith.negf %3 : vector<16x128xf32>
      %20 = math.exp %19 : vector<16x128xf32>
      %cst = arith.constant 1.000000e+00 : f32
      %21 = vector.broadcast %cst : f32 to vector<16x128xf32>
      %22 = arith.addf %21, %20 : vector<16x128xf32>
      %23 = arith.divf %21, %22 : vector<16x128xf32>
      %24 = math.log %23 : vector<16x128xf32>
      %cst_10 = arith.constant -1.000000e+02 : f32
      %25 = vector.broadcast %cst_10 : f32 to vector<16x128xf32>
      %26 = arith.maximumf %24, %25 : vector<16x128xf32>
      %27 = arith.subf %24, %3 : vector<16x128xf32>
      %cst_11 = arith.constant -1.000000e+02 : f32
      %28 = vector.broadcast %cst_11 : f32 to vector<16x128xf32>
      %29 = arith.maximumf %27, %28 : vector<16x128xf32>
      %cst_12 = arith.constant 1.000000e+00 : f32
      %30 = vector.broadcast %cst_12 : f32 to vector<16x128xf32>
      %31 = arith.cmpf oge, %23, %30 : vector<16x128xf32>
      %cst_13 = arith.constant -1.000000e+02 : f32
      %32 = vector.broadcast %cst_13 : f32 to vector<16x128xf32>
      %33 = arith.select %31, %32, %29 : vector<16x128xi1>, vector<16x128xf32>
      %cst_14 = arith.constant 0.000000e+00 : f32
      %34 = vector.broadcast %cst_14 : f32 to vector<16x128xf32>
      %35 = arith.cmpf ole, %23, %34 : vector<16x128xf32>
      %cst_15 = arith.constant 0.000000e+00 : f32
      %36 = vector.broadcast %cst_15 : f32 to vector<16x128xf32>
      %37 = arith.select %35, %36, %33 : vector<16x128xi1>, vector<16x128xf32>
      %38 = arith.mulf %4, %26 : vector<16x128xf32>
      %cst_16 = arith.constant 1.000000e+00 : f32
      %39 = vector.broadcast %cst_16 : f32 to vector<16x128xf32>
      %40 = arith.subf %39, %4 : vector<16x128xf32>
      %41 = arith.mulf %40, %37 : vector<16x128xf32>
      %42 = arith.addf %38, %41 : vector<16x128xf32>
      %cst_17 = arith.constant 0.000000e+00 : f32
      %43 = vector.broadcast %cst_17 : f32 to vector<16x128xf32>
      %44 = arith.subf %43, %42 : vector<16x128xf32>
      %45 = arith.mulf %23, %4 : vector<16x128xf32>
      %46 = arith.addf %23, %4 : vector<16x128xf32>
      %c0_18 = arith.constant 0 : index
      %c0_19 = arith.constant 0 : index
      %c0_20 = arith.constant 0 : index
      %47 = vector.load %arg5[%c0_18, %c0_19, %c0_20] : memref<3x8x128xf32, #tpu.memory_space<vmem>>, vector<1x8x128xf32>
      %48 = vector.shape_cast %47 : vector<1x8x128xf32> to vector<8x128xf32>
      %49 = vector.shape_cast %45 : vector<16x128xf32> to vector<2x8x128xf32>
      %cst_21 = arith.constant dense<0.000000e+00> : vector<8x128xf32>
      %50 = vector.multi_reduction <add>, %49, %cst_21 [0] : vector<2x8x128xf32> to vector<8x128xf32>
      %51 = arith.addf %48, %50 : vector<8x128xf32>
      %c0_22 = arith.constant 0 : index
      %c0_23 = arith.constant 0 : index
      %c0_24 = arith.constant 0 : index
      %52 = vector.load %arg5[%c0_22, %c0_23, %c0_24] : memref<3x8x128xf32, #tpu.memory_space<vmem>>, vector<1x8x128xf32>
      %53 = vector.shape_cast %52 : vector<1x8x128xf32> to vector<8x128xf32>
      %54 = vector.shape_cast %51 : vector<8x128xf32> to vector<1x8x128xf32>
      tpu.vector_store %arg5[%c0_22, %c0_23, %c0_24], %54 {strides = array<i32>} : memref<3x8x128xf32, #tpu.memory_space<vmem>>, vector<1x8x128xf32>,
      %c1 = arith.constant 1 : index
      %c0_25 = arith.constant 0 : index
      %c0_26 = arith.constant 0 : index
      %55 = vector.load %arg5[%c1, %c0_25, %c0_26] : memref<3x8x128xf32, #tpu.memory_space<vmem>>, vector<1x8x128xf32>
      %56 = vector.shape_cast %55 : vector<1x8x128xf32> to vector<8x128xf32>
      %57 = vector.shape_cast %46 : vector<16x128xf32> to vector<2x8x128xf32>
      %cst_27 = arith.constant dense<0.000000e+00> : vector<8x128xf32>
      %58 = vector.multi_reduction <add>, %57, %cst_27 [0] : vector<2x8x128xf32> to vector<8x128xf32>
      %59 = arith.addf %56, %58 : vector<8x128xf32>
      %c1_28 = arith.constant 1 : index
      %c0_29 = arith.constant 0 : index
      %c0_30 = arith.constant 0 : index
      %60 = vector.load %arg5[%c1_28, %c0_29, %c0_30] : memref<3x8x128xf32, #tpu.memory_space<vmem>>, vector<1x8x128xf32>
      %61 = vector.shape_cast %60 : vector<1x8x128xf32> to vector<8x128xf32>
      %62 = vector.shape_cast %59 : vector<8x128xf32> to vector<1x8x128xf32>
      tpu.vector_store %arg5[%c1_28, %c0_29, %c0_30], %62 {strides = array<i32>} : memref<3x8x128xf32, #tpu.memory_space<vmem>>, vector<1x8x128xf32>,
      %c2 = arith.constant 2 : index
      %c0_31 = arith.constant 0 : index
      %c0_32 = arith.constant 0 : index
      %63 = vector.load %arg5[%c2, %c0_31, %c0_32] : memref<3x8x128xf32, #tpu.memory_space<vmem>>, vector<1x8x128xf32>
      %64 = vector.shape_cast %63 : vector<1x8x128xf32> to vector<8x128xf32>
      %65 = vector.shape_cast %44 : vector<16x128xf32> to vector<2x8x128xf32>
      %cst_33 = arith.constant dense<0.000000e+00> : vector<8x128xf32>
      %66 = vector.multi_reduction <add>, %65, %cst_33 [0] : vector<2x8x128xf32> to vector<8x128xf32>
      %67 = arith.addf %64, %66 : vector<8x128xf32>
      %c2_34 = arith.constant 2 : index
      %c0_35 = arith.constant 0 : index
      %c0_36 = arith.constant 0 : index
      %68 = vector.load %arg5[%c2_34, %c0_35, %c0_36] : memref<3x8x128xf32, #tpu.memory_space<vmem>>, vector<1x8x128xf32>
      %69 = vector.shape_cast %68 : vector<1x8x128xf32> to vector<8x128xf32>
      %70 = vector.shape_cast %67 : vector<8x128xf32> to vector<1x8x128xf32>
      tpu.vector_store %arg5[%c2_34, %c0_35, %c0_36], %70 {strides = array<i32>} : memref<3x8x128xf32, #tpu.memory_space<vmem>>, vector<1x8x128xf32>,
    } else {
    }
    %c2048_i32_6 = arith.constant 2048 : i32
    %13 = arith.cmpi sgt, %9, %c2048_i32_6 : i32
    %14 = arith.extui %13 : i1 to i32
    %c0_i32_7 = arith.constant 0 : i32
    %15 = arith.cmpi ne, %14, %c0_i32_7 : i32
    scf.if %15 {
      %19 = tpu.iota {dimensions = array<i32: 0>} : vector<16x128xi32>
      %20 = tpu.iota {dimensions = array<i32: 1>} : vector<16x128xi32>
      %21 = vector.broadcast %7 : i32 to vector<16x128xi32>
      %22 = arith.addi %21, %19 : vector<16x128xi32>
      %c128_i32_10 = arith.constant 128 : i32
      %23 = vector.broadcast %c128_i32_10 : i32 to vector<16x128xi32>
      %24 = arith.muli %22, %23 : vector<16x128xi32>
      %25 = arith.addi %24, %20 : vector<16x128xi32>
      %c2048_i32_11 = arith.constant 2048 : i32
      %26 = vector.broadcast %c2048_i32_11 : i32 to vector<16x128xi32>
      %27 = arith.cmpi slt, %25, %26 : vector<16x128xi32>
      %cst = arith.constant 0.000000e+00 : f32
      %28 = vector.broadcast %cst : f32 to vector<16x128xf32>
      %29 = arith.select %27, %3, %28 : vector<16x128xi1>, vector<16x128xf32>
      %cst_12 = arith.constant 0.000000e+00 : f32
      %30 = vector.broadcast %cst_12 : f32 to vector<16x128xf32>
      %31 = arith.select %27, %4, %30 : vector<16x128xi1>, vector<16x128xf32>
      %32 = arith.negf %29 : vector<16x128xf32>
      %33 = math.exp %32 : vector<16x128xf32>
      %cst_13 = arith.constant 1.000000e+00 : f32
      %34 = vector.broadcast %cst_13 : f32 to vector<16x128xf32>
      %35 = arith.addf %34, %33 : vector<16x128xf32>
      %36 = arith.divf %34, %35 : vector<16x128xf32>
      %37 = math.log %36 : vector<16x128xf32>
      %cst_14 = arith.constant -1.000000e+02 : f32
      %38 = vector.broadcast %cst_14 : f32 to vector<16x128xf32>
      %39 = arith.maximumf %37, %38 : vector<16x128xf32>
      %40 = arith.subf %37, %29 : vector<16x128xf32>
      %cst_15 = arith.constant -1.000000e+02 : f32
      %41 = vector.broadcast %cst_15 : f32 to vector<16x128xf32>
      %42 = arith.maximumf %40, %41 : vector<16x128xf32>
      %cst_16 = arith.constant 1.000000e+00 : f32
      %43 = vector.broadcast %cst_16 : f32 to vector<16x128xf32>
      %44 = arith.cmpf oge, %36, %43 : vector<16x128xf32>
      %cst_17 = arith.constant -1.000000e+02 : f32
      %45 = vector.broadcast %cst_17 : f32 to vector<16x128xf32>
      %46 = arith.select %44, %45, %42 : vector<16x128xi1>, vector<16x128xf32>
      %cst_18 = arith.constant 0.000000e+00 : f32
      %47 = vector.broadcast %cst_18 : f32 to vector<16x128xf32>
      %48 = arith.cmpf ole, %36, %47 : vector<16x128xf32>
      %cst_19 = arith.constant 0.000000e+00 : f32
      %49 = vector.broadcast %cst_19 : f32 to vector<16x128xf32>
      %50 = arith.select %48, %49, %46 : vector<16x128xi1>, vector<16x128xf32>
      %51 = arith.mulf %31, %39 : vector<16x128xf32>
      %cst_20 = arith.constant 1.000000e+00 : f32
      %52 = vector.broadcast %cst_20 : f32 to vector<16x128xf32>
      %53 = arith.subf %52, %31 : vector<16x128xf32>
      %54 = arith.mulf %53, %50 : vector<16x128xf32>
      %55 = arith.addf %51, %54 : vector<16x128xf32>
      %cst_21 = arith.constant 0.000000e+00 : f32
      %56 = vector.broadcast %cst_21 : f32 to vector<16x128xf32>
      %57 = arith.subf %56, %55 : vector<16x128xf32>
      %cst_22 = arith.constant 0.000000e+00 : f32
      %58 = vector.broadcast %cst_22 : f32 to vector<16x128xf32>
      %59 = arith.select %27, %36, %58 : vector<16x128xi1>, vector<16x128xf32>
      %cst_23 = arith.constant 0.000000e+00 : f32
      %60 = vector.broadcast %cst_23 : f32 to vector<16x128xf32>
      %61 = arith.select %27, %57, %60 : vector<16x128xi1>, vector<16x128xf32>
      %62 = arith.mulf %59, %31 : vector<16x128xf32>
      %63 = arith.addf %59, %31 : vector<16x128xf32>
      %c0_24 = arith.constant 0 : index
      %c0_25 = arith.constant 0 : index
      %c0_26 = arith.constant 0 : index
      %64 = vector.load %arg5[%c0_24, %c0_25, %c0_26] : memref<3x8x128xf32, #tpu.memory_space<vmem>>, vector<1x8x128xf32>
      %65 = vector.shape_cast %64 : vector<1x8x128xf32> to vector<8x128xf32>
      %66 = vector.shape_cast %62 : vector<16x128xf32> to vector<2x8x128xf32>
      %cst_27 = arith.constant dense<0.000000e+00> : vector<8x128xf32>
      %67 = vector.multi_reduction <add>, %66, %cst_27 [0] : vector<2x8x128xf32> to vector<8x128xf32>
      %68 = arith.addf %65, %67 : vector<8x128xf32>
      %c0_28 = arith.constant 0 : index
      %c0_29 = arith.constant 0 : index
      %c0_30 = arith.constant 0 : index
      %69 = vector.load %arg5[%c0_28, %c0_29, %c0_30] : memref<3x8x128xf32, #tpu.memory_space<vmem>>, vector<1x8x128xf32>
      %70 = vector.shape_cast %69 : vector<1x8x128xf32> to vector<8x128xf32>
      %71 = vector.shape_cast %68 : vector<8x128xf32> to vector<1x8x128xf32>
      tpu.vector_store %arg5[%c0_28, %c0_29, %c0_30], %71 {strides = array<i32>} : memref<3x8x128xf32, #tpu.memory_space<vmem>>, vector<1x8x128xf32>,
      %c1 = arith.constant 1 : index
      %c0_31 = arith.constant 0 : index
      %c0_32 = arith.constant 0 : index
      %72 = vector.load %arg5[%c1, %c0_31, %c0_32] : memref<3x8x128xf32, #tpu.memory_space<vmem>>, vector<1x8x128xf32>
      %73 = vector.shape_cast %72 : vector<1x8x128xf32> to vector<8x128xf32>
      %74 = vector.shape_cast %63 : vector<16x128xf32> to vector<2x8x128xf32>
      %cst_33 = arith.constant dense<0.000000e+00> : vector<8x128xf32>
      %75 = vector.multi_reduction <add>, %74, %cst_33 [0] : vector<2x8x128xf32> to vector<8x128xf32>
      %76 = arith.addf %73, %75 : vector<8x128xf32>
      %c1_34 = arith.constant 1 : index
      %c0_35 = arith.constant 0 : index
      %c0_36 = arith.constant 0 : index
      %77 = vector.load %arg5[%c1_34, %c0_35, %c0_36] : memref<3x8x128xf32, #tpu.memory_space<vmem>>, vector<1x8x128xf32>
      %78 = vector.shape_cast %77 : vector<1x8x128xf32> to vector<8x128xf32>
      %79 = vector.shape_cast %76 : vector<8x128xf32> to vector<1x8x128xf32>
      tpu.vector_store %arg5[%c1_34, %c0_35, %c0_36], %79 {strides = array<i32>} : memref<3x8x128xf32, #tpu.memory_space<vmem>>, vector<1x8x128xf32>,
      %c2 = arith.constant 2 : index
      %c0_37 = arith.constant 0 : index
      %c0_38 = arith.constant 0 : index
      %80 = vector.load %arg5[%c2, %c0_37, %c0_38] : memref<3x8x128xf32, #tpu.memory_space<vmem>>, vector<1x8x128xf32>
      %81 = vector.shape_cast %80 : vector<1x8x128xf32> to vector<8x128xf32>
      %82 = vector.shape_cast %61 : vector<16x128xf32> to vector<2x8x128xf32>
      %cst_39 = arith.constant dense<0.000000e+00> : vector<8x128xf32>
      %83 = vector.multi_reduction <add>, %82, %cst_39 [0] : vector<2x8x128xf32> to vector<8x128xf32>
      %84 = arith.addf %81, %83 : vector<8x128xf32>
      %c2_40 = arith.constant 2 : index
      %c0_41 = arith.constant 0 : index
      %c0_42 = arith.constant 0 : index
      %85 = vector.load %arg5[%c2_40, %c0_41, %c0_42] : memref<3x8x128xf32, #tpu.memory_space<vmem>>, vector<1x8x128xf32>
      %86 = vector.shape_cast %85 : vector<1x8x128xf32> to vector<8x128xf32>
      %87 = vector.shape_cast %84 : vector<8x128xf32> to vector<1x8x128xf32>
      tpu.vector_store %arg5[%c2_40, %c0_41, %c0_42], %87 {strides = array<i32>} : memref<3x8x128xf32, #tpu.memory_space<vmem>>, vector<1x8x128xf32>,
    } else {
    }
    %c0_i32_8 = arith.constant 0 : i32
    %16 = arith.cmpi eq, %arg1, %c0_i32_8 : i32
    %17 = arith.extui %16 : i1 to i32
    %c0_i32_9 = arith.constant 0 : i32
    %18 = arith.cmpi ne, %17, %c0_i32_9 : i32
    scf.if %18 {
      %c0_10 = arith.constant 0 : index
      %c0_11 = arith.constant 0 : index
      %c0_12 = arith.constant 0 : index
      %19 = vector.load %arg5[%c0_10, %c0_11, %c0_12] : memref<3x8x128xf32, #tpu.memory_space<vmem>>, vector<3x8x128xf32>
      %c0_13 = arith.constant 0 : index
      %c0_14 = arith.constant 0 : index
      %c0_15 = arith.constant 0 : index
      %c0_16 = arith.constant 0 : index
      %20 = vector.load %arg4[%c0_13, %c0_14, %c0_15, %c0_16] : memref<1x3x8x128xf32, #tpu.memory_space<vmem>>, vector<1x3x8x128xf32>
      %21 = vector.shape_cast %20 : vector<1x3x8x128xf32> to vector<3x8x128xf32>
      %22 = vector.shape_cast %19 : vector<3x8x128xf32> to vector<1x3x8x128xf32>
      tpu.vector_store %arg4[%c0_13, %c0_14, %c0_15, %c0_16], %22 {strides = array<i32>} : memref<1x3x8x128xf32, #tpu.memory_space<vmem>>, vector<1x3x8x128xf32>,
    } else {
    }
    return
  }
  func.func @transform_0(%arg0: i32, %arg1: i32) -> (i32, i32) {
    %c1_i32 = arith.constant 1 : i32
    %0 = arith.muli %arg0, %c1_i32 : i32
    %1 = arith.addi %0, %arg1 : i32
    %c0_i32 = arith.constant 0 : i32
    %2 = arith.minsi %1, %c0_i32 : i32
    %c0_i32_0 = arith.constant 0 : i32
    %c0_i32_1 = arith.constant 0 : i32
    return %2, %c0_i32_0 : i32, i32
  }
  func.func @transform_1(%arg0: i32, %arg1: i32) -> (i32, i32) {
    %c1_i32 = arith.constant 1 : i32
    %0 = arith.muli %arg0, %c1_i32 : i32
    %1 = arith.addi %0, %arg1 : i32
    %c0_i32 = arith.constant 0 : i32
    %2 = arith.minsi %1, %c0_i32 : i32
    %c0_i32_0 = arith.constant 0 : i32
    %c0_i32_1 = arith.constant 0 : i32
    return %2, %c0_i32_0 : i32, i32
  }
  func.func @transform_2(%arg0: i32, %arg1: i32) -> (i32, i32, i32, i32) {
    %c0_i32 = arith.constant 0 : i32
    %c0_i32_0 = arith.constant 0 : i32
    %c0_i32_1 = arith.constant 0 : i32
    %c0_i32_2 = arith.constant 0 : i32
    return %arg0, %c0_i32, %c0_i32_0, %c0_i32_1 : i32, i32, i32, i32
  }
}

</mosaic_0001>

<llo_original>
// kernel: tpu_custom_call.1
$region0: #{tpu_custom_call.1}
  #allocation0 [shape = 'u32[]', space=smem, size = 0x4, offset = 0x4, fixed_abs, tag = 'smem constant byte address 0x4 - core index']
  #allocation1 [shape = 'u32[144,128]{1,0:T(1,128)}', space=vmem, size = 0x12000, scoped, tag = 'internal scratch']
  #allocation2 [shape = 'f32[3,8,128]{2,1,0:T(8,128)}', space=vmem, size = 0x3000, scoped, tag = 'scratch operand']
  %s0 = inlined_call_operand.hbm [shape: f32[16,128], index: 0, kind: input, shape index: {}]
  %s1 = inlined_call_operand.hbm [shape: f32[16,128], index: 1, kind: input, shape index: {}]
  %s2 = inlined_call_operand.hbm [shape: f32[1,3,8,128], index: 2, kind: output, shape index: {}]
  %s3 = sld [smem:[#allocation0]]
  $region42: #{tpu_custom_call.1} parent=0
    _
  %s5 = ssub.s32 1, %s3
  %s6 = scalar_select 0, %s5, %s3
  $region1: #{tpu_custom_call.1} parent=0
    #allocation3 [shape = 'u8[8192]{0}', space=vmem, size = 0x2000, scoped, tag = 'input window, operand 0, single buffered']
    #allocation4 [shape = 's32[1]{0}', space=sflag, size = 0x4, scoped, tag = 'scoped memory for tpu_custom_call.1']
    #allocation5 [shape = 's32[1]{0}', space=sflag, size = 0x4, scoped, tag = 'scoped memory for tpu_custom_call.1']
    #allocation6 [shape = 'u8[8192]{0}', space=vmem, size = 0x2000, scoped, tag = 'input window, operand 1, single buffered']
    #allocation7 [shape = 's32[1]{0}', space=sflag, size = 0x4, scoped, tag = 'scoped memory for tpu_custom_call.1']
    #allocation8 [shape = 'u8[12288]{0}', space=vmem, size = 0x3000, scoped, tag = 'output window, operand 0, single buffered']
    %7 = vsyncpa [#allocation4], 0
    %8 = vsyncpa [#allocation7], 0
    %9 = vsyncpa [#allocation5], 0
    // Predicated region
    $region2: #{tpu_custom_call.1} parent=1 // pred_check
      _
    $region3: #{tpu_custom_call.1} parent=1 // pred_check_branch
      %11 = sbr.rel (0) target = $region5
    $region4: #{tpu_custom_call.1} parent=1 // pred_region
      %s12 = sadd.s32 0, 0
      %p13 = scmp.lt.s32.totalorder %s12, 0
      %s14 = scalar_select %p13, %s12, 0
      %s15 = smul.u32 2, %s14
      %s17 = ssub.s32 256, 256
      %18 = vsyncadd [#allocation4], %s17
      %s19 = smul.addr %s15, 128
      %s20 = scalar_lea.hbm %s0, %s19
      %s21 = sshll.u32 [#allocation3], 4
      %s22 = int_to_ptr.vmem [resolvable:$true] %s21
      %27 = dma.hbm_to_vmem [thread:$0]  %s20, 256, %s22, [#allocation4], 128, 128, 8
    $region5: #{tpu_custom_call.1} parent=1 // pred_fallthru
      _
    // Predicated region
    $region6: #{tpu_custom_call.1} parent=1 // pred_check
      _
    $region7: #{tpu_custom_call.1} parent=1 // pred_check_branch
      %29 = sbr.rel (0) target = $region9
    $region8: #{tpu_custom_call.1} parent=1 // pred_region
      %s30 = sadd.s32 0, 0
      %p31 = scmp.lt.s32.totalorder %s30, 0
      %s32 = scalar_select %p31, %s30, 0
      %s33 = smul.u32 2, %s32
      %s35 = ssub.s32 256, 256
      %36 = vsyncadd [#allocation7], %s35
      %s37 = smul.addr %s33, 128
      %s38 = scalar_lea.hbm %s1, %s37
      %s39 = sshll.u32 [#allocation6], 4
      %s40 = int_to_ptr.vmem [resolvable:$true] %s39
      %45 = dma.hbm_to_vmem [thread:$0]  %s38, 256, %s40, [#allocation7], 128, 128, 8
    $region9: #{tpu_custom_call.1} parent=1 // pred_fallthru
      _
    // Predicated region
    $region10: #{tpu_custom_call.1} parent=1 // pred_check
      _
    $region11: #{tpu_custom_call.1} parent=1 // pred_check_branch
      %47 = sbr.rel (0) target = $region13
    $region12: #{tpu_custom_call.1} parent=1 // pred_region
      %48 = dma.done [#allocation4], 256
    $region13: #{tpu_custom_call.1} parent=1 // pred_fallthru
      _
    // Predicated region
    $region14: #{tpu_custom_call.1} parent=1 // pred_check
      _
    $region15: #{tpu_custom_call.1} parent=1 // pred_check_branch
      %50 = sbr.rel (0) target = $region17
    $region16: #{tpu_custom_call.1} parent=1 // pred_region
      %51 = dma.done [#allocation7], 256
    $region17: #{tpu_custom_call.1} parent=1 // pred_fallthru
      _
    %s52 = sadd.s32 0, 0
    %p53 = scmp.lt.s32.totalorder %s52, 0
    %s54 = scalar_select %p53, %s52, 0
    %s55 = smul.u32 2, %s54
    %s56 = sadd.s32 0, 0
    %p57 = scmp.lt.s32.totalorder %s56, 0
    %s58 = scalar_select %p57, %s56, 0
    %s59 = smul.u32 2, %s58
    %p60 = scmp.eq.s32.totalorder 0, 0
    // Predicated region
    $region18: #{tpu_custom_call.1} parent=1 // pred_check
      %p61 = pneg %p60
    $region19: #{tpu_custom_call.1} parent=1 // pred_check_branch
      %63 = sbr.rel (%p61) target = $region21
    $region20: #{tpu_custom_call.1} parent=1 // pred_region
      %64 = vst [vmem:[#allocation2] sm:$0xff] 0.0
      %65 = vst [vmem:[#allocation2 + $0x8] sm:$0xff] 0.0
      %66 = vst [vmem:[#allocation2 + $0x10] sm:$0xff] 0.0
    $region21: #{tpu_custom_call.1} parent=1 // pred_fallthru
      _
    %v67 = vld [vmem:[#allocation3] sm:$0xff]
    %v68 = vld [vmem:[#allocation3 + $0x8] sm:$0xff]
    %v69 = vld [vmem:[#allocation6] sm:$0xff]
    %v70 = vld [vmem:[#allocation6 + $0x8] sm:$0xff]
    %s71 = sadd.s32 0, 0
    %s72 = smul.u32 %s71, 16
    %s73 = sadd.s32 %s72, 16
    %s74 = smul.u32 %s73, 128
    %p75 = scmp.le.s32.totalorder %s74, 2048
    // Predicated region
    $region22: #{tpu_custom_call.1} parent=1 // pred_check
      %p76 = pneg %p75
    $region23: #{tpu_custom_call.1} parent=1 // pred_check_branch
      %78 = sbr.rel (%p76) target = $region25
    $region24: #{tpu_custom_call.1} parent=1 // pred_region
      %v79 = vxor.u32 %v67, 2147483648
      %v80 = vxor.u32 %v68, 2147483648
      %v81 = vmul.f32 %v79, 1.442695
      %v82 = vpow.pop %v81
      %v83 = vmul.f32 %v80, 1.442695
      %v84 = vpow.pop %v83
      %v85 = vadd.f32 %v82, 1.0
      %v86 = vadd.f32 %v84, 1.0
      %v87 = vrcp.pop %v85
      %v88 = vmul.f32 1.0, %v87
      %v89 = vrcp.pop %v86
      %v90 = vmul.f32 1.0, %v89
      %v91 = vlog2.pop %v88
      %v92 = vmul.f32 %v91, 0.6931472
      %v93 = vlog2.pop %v90
      %v94 = vmul.f32 %v93, 0.6931472
      %v95 = vmax.f32 %v92, -100.0
      %v96 = vmax.f32 %v94, -100.0
      %v97 = vsub.f32 %v92, %v67
      %v98 = vsub.f32 %v94, %v68
      %v99 = vmax.f32 %v97, -100.0
      %v100 = vmax.f32 %v98, -100.0
      %vm101 = vcmp.ge.f32.partialorder %v88, 1.0
      %vm102 = vcmp.ge.f32.partialorder %v90, 1.0
      %v103 = vsel %vm101, -100.0, %v99
      %v104 = vsel %vm102, -100.0, %v100
      %vm105 = vcmp.le.f32.partialorder %v88, 0.0
      %vm106 = vcmp.le.f32.partialorder %v90, 0.0
      %v107 = vsel %vm105, 0.0, %v103
      %v108 = vsel %vm106, 0.0, %v104
      %v109 = vmul.f32 %v69, %v95
      %v110 = vmul.f32 %v70, %v96
      %v111 = vsub.f32 1.0, %v69
      %v112 = vsub.f32 1.0, %v70
      %v113 = vmul.f32 %v111, %v107
      %v114 = vmul.f32 %v112, %v108
      %v115 = vadd.f32 %v109, %v113
      %v116 = vadd.f32 %v110, %v114
      %v117 = vsub.f32 0.0, %v115
      %v118 = vsub.f32 0.0, %v116
      %v119 = vmul.f32 %v88, %v69
      %v120 = vmul.f32 %v90, %v70
      %v121 = vadd.f32 %v88, %v69
      %v122 = vadd.f32 %v90, %v70
      %v123 = vld [vmem:[#allocation2] sm:$0xff]
      %v124 = vadd.f32 %v119, %v120
      %v125 = vadd.f32 %v123, %v124
      %126 = vst [vmem:[#allocation2] sm:$0xff] %v125
      %s127 = scalar_lea.vmem [#allocation2], 8
      %v128 = vld [vmem:[%s127] sm:$0xff]
      %v129 = vadd.f32 %v121, %v122
      %v130 = vadd.f32 %v128, %v129
      %131 = vst [vmem:[%s127] sm:$0xff] %v130
      %s132 = scalar_lea.vmem [#allocation2], 16
      %v133 = vld [vmem:[%s132] sm:$0xff]
      %v134 = vadd.f32 %v117, %v118
      %v135 = vadd.f32 %v133, %v134
      %136 = vst [vmem:[%s132] sm:$0xff] %v135
    $region25: #{tpu_custom_call.1} parent=1 // pred_fallthru
      _
    %p137 = scmp.gt.s32.totalorder %s74, 2048
    // Predicated region
    $region26: #{tpu_custom_call.1} parent=1 // pred_check
      %p138 = pneg %p137
    $region27: #{tpu_custom_call.1} parent=1 // pred_check_branch
      %140 = sbr.rel (%p138) target = $region29
    $region28: #{tpu_custom_call.1} parent=1 // pred_region
      %v141 = vlaneseq
      %v142 = vshrl.u32 %v141, 7
      %v143 = vadd.s32 %v142, 8
      %v144 = vlaneseq
      %v145 = vand.u32 %v144, 127
      %v146 = vstv %s72
      %v147 = vadd.s32 %v146, %v142
      %v148 = vadd.s32 %v146, %v143
      %v149 = vmul.u32 %v147, 128
      %v150 = vmul.u32 %v148, 128
      %v151 = vadd.s32 %v149, %v145
      %v152 = vadd.s32 %v150, %v145
      %vm153 = vcmp.lt.s32.totalorder %v151, 2048
      %vm154 = vcmp.lt.s32.totalorder %v152, 2048
      %v155 = vsel %vm153, %v67, 0.0
      %v156 = vsel %vm154, %v68, 0.0
      %v157 = vsel %vm153, %v69, 0.0
      %v158 = vsel %vm154, %v70, 0.0
      %v159 = vxor.u32 %v155, 2147483648
      %v160 = vxor.u32 %v156, 2147483648
      %v161 = vmul.f32 %v159, 1.442695
      %v162 = vpow.pop %v161
      %v163 = vmul.f32 %v160, 1.442695
      %v164 = vpow.pop %v163
      %v165 = vadd.f32 %v162, 1.0
      %v166 = vadd.f32 %v164, 1.0
      %v167 = vrcp.pop %v165
      %v168 = vmul.f32 1.0, %v167
      %v169 = vrcp.pop %v166
      %v170 = vmul.f32 1.0, %v169
      %v171 = vlog2.pop %v168
      %v172 = vmul.f32 %v171, 0.6931472
      %v173 = vlog2.pop %v170
      %v174 = vmul.f32 %v173, 0.6931472
      %v175 = vmax.f32 %v172, -100.0
      %v176 = vmax.f32 %v174, -100.0
      %v177 = vsub.f32 %v172, %v155
      %v178 = vsub.f32 %v174, %v156
      %v179 = vmax.f32 %v177, -100.0
      %v180 = vmax.f32 %v178, -100.0
      %vm181 = vcmp.ge.f32.partialorder %v168, 1.0
      %vm182 = vcmp.ge.f32.partialorder %v170, 1.0
      %v183 = vsel %vm181, -100.0, %v179
      %v184 = vsel %vm182, -100.0, %v180
      %vm185 = vcmp.le.f32.partialorder %v168, 0.0
      %vm186 = vcmp.le.f32.partialorder %v170, 0.0
      %v187 = vsel %vm185, 0.0, %v183
      %v188 = vsel %vm186, 0.0, %v184
      %v189 = vmul.f32 %v157, %v175
      %v190 = vmul.f32 %v158, %v176
      %v191 = vsub.f32 1.0, %v157
      %v192 = vsub.f32 1.0, %v158
      %v193 = vmul.f32 %v191, %v187
      %v194 = vmul.f32 %v192, %v188
      %v195 = vadd.f32 %v189, %v193
      %v196 = vadd.f32 %v190, %v194
      %v197 = vsub.f32 0.0, %v195
      %v198 = vsub.f32 0.0, %v196
      %v199 = vsel %vm153, %v168, 0.0
      %v200 = vsel %vm154, %v170, 0.0
      %v201 = vsel %vm153, %v197, 0.0
      %v202 = vsel %vm154, %v198, 0.0
      %v203 = vmul.f32 %v199, %v157
      %v204 = vmul.f32 %v200, %v158
      %v205 = vadd.f32 %v199, %v157
      %v206 = vadd.f32 %v200, %v158
      %v207 = vld [vmem:[#allocation2] sm:$0xff]
      %v208 = vadd.f32 %v203, %v204
      %v209 = vadd.f32 %v207, %v208
      %210 = vst [vmem:[#allocation2] sm:$0xff] %v209
      %s211 = scalar_lea.vmem [#allocation2], 8
      %v212 = vld [vmem:[%s211] sm:$0xff]
      %v213 = vadd.f32 %v205, %v206
      %v214 = vadd.f32 %v212, %v213
      %215 = vst [vmem:[%s211] sm:$0xff] %v214
      %s216 = scalar_lea.vmem [#allocation2], 16
      %v217 = vld [vmem:[%s216] sm:$0xff]
      %v218 = vadd.f32 %v201, %v202
      %v219 = vadd.f32 %v217, %v218
      %220 = vst [vmem:[%s216] sm:$0xff] %v219
    $region29: #{tpu_custom_call.1} parent=1 // pred_fallthru
      _
    // Predicated region
    $region30: #{tpu_custom_call.1} parent=1 // pred_check
      %p221 = pneg %p60
    $region31: #{tpu_custom_call.1} parent=1 // pred_check_branch
      %223 = sbr.rel (%p221) target = $region33
    $region32: #{tpu_custom_call.1} parent=1 // pred_region
      %v224 = vld [vmem:[#allocation2] sm:$0xff]
      %v225 = vld [vmem:[#allocation2 + $0x8] sm:$0xff]
      %v226 = vld [vmem:[#allocation2 + $0x10] sm:$0xff]
      %227 = vst [vmem:[#allocation8] sm:$0xff] %v224
      %228 = vst [vmem:[#allocation8 + $0x8] sm:$0xff] %v225
      %229 = vst [vmem:[#allocation8 + $0x10] sm:$0xff] %v226
    $region33: #{tpu_custom_call.1} parent=1 // pred_fallthru
      _
    // Predicated region
    $region34: #{tpu_custom_call.1} parent=1 // pred_check
      _
    $region35: #{tpu_custom_call.1} parent=1 // pred_check_branch
      %231 = sbr.rel (0) target = $region37
    $region36: #{tpu_custom_call.1} parent=1 // pred_region
      %s233 = ssub.s32 384, 384
      %234 = vsyncadd [#allocation5], %s233
      %s235 = sshll.u32 [#allocation8], 4
      %s236 = int_to_ptr.vmem [resolvable:$true] %s235
      %241 = dma.vmem_to_hbm [thread:$0]  %s236, 384, %s2, [#allocation5], 128, 128, 8
    $region37: #{tpu_custom_call.1} parent=1 // pred_fallthru
      _
    // Predicated region
    $region38: #{tpu_custom_call.1} parent=1 // pred_check
      _
    $region39: #{tpu_custom_call.1} parent=1 // pred_check_branch
      %243 = sbr.rel (0) target = $region41
    $region40: #{tpu_custom_call.1} parent=1 // pred_region
      %244 = dma.done [#allocation5], 384
    $region41: #{tpu_custom_call.1} parent=1 // pred_fallthru
      _
    %245 = vsyncpa [#allocation4], 1
    %246 = vsyncpa [#allocation7], 1
    %247 = vsyncpa [#allocation5], 1

</llo_original>
